<compile_context>
chip_gen: v5e
topology: v5e:2x2
jax: 0.10.0
libtpu: 0.0.40
codegen_flags: <defaults>
</compile_context>

<pallas_src>
import jax
import jax.numpy as jnp
from jax.experimental import pallas as pl
from jax.experimental.pallas import tpu as pltpu


def _round_up(n: int, m: int) -> int:
    return ((n + m - 1) // m) * m


def _choose_batch_tile(B: int, cap: int = 2048) -> int:
    # Tiny batches: one full-dim block (also handles B not divisible by 8).
    if B < 16:
        return B
    # Aim for >= 2 grid steps so v7x's two TensorCores both get batch work
    # (no-op on v5e/v6e); cap the tile so double-buffered f32 x-tiles fit VMEM.
    tb = _round_up(pl.cdiv(B, 2), 8)
    return min(tb, cap)


def mlp_kernel(x_ref, w1_ref, b1_ref, w3_ref, b3_ref, w2_ref, b2_ref, o_ref):
    # x_ref: [TB, F_in] f32 (cast to bf16 here -> fuses the cast into the HBM-bound read)
    # w*_ref: pre-transposed [in, out_pad] bf16 (VMEM-resident); b*_ref: [1, out_pad] f32
    # o_ref: [TB, N_pad] bf16 (lane-dense, unmasked vst)
    x = x_ref[...].astype(jnp.bfloat16)
    h = jnp.dot(x, w1_ref[...], preferred_element_type=jnp.float32) + b1_ref[...]
    h = jnp.maximum(h, 0.0)
    h = jnp.dot(h.astype(jnp.bfloat16), w3_ref[...],
                preferred_element_type=jnp.float32) + b3_ref[...]
    h = jnp.maximum(h, 0.0)
    h = jnp.dot(h.astype(jnp.bfloat16), w2_ref[...],
                preferred_element_type=jnp.float32) + b2_ref[...]
    o_ref[...] = jnp.tanh(h).astype(o_ref.dtype)


def simple_net_forward(x, params):
    """x: [B, C, H, W] float32. params: PyTorch-convention weights ([out, in])."""
    B = x.shape[0]
    x2d = x.reshape(B, -1)                      # torch.flatten(x, start_dim=1)
    F_in = x2d.shape[1]
    Hf = params["w1"].shape[0]                  # hidden_features
    Nf = params["w2"].shape[0]                  # out_features

    H_pad = _round_up(Hf, 128)                  # lane-dense hidden width
    N_pad = _round_up(Nf, 128)                  # lane-dense output width

    TB = _choose_batch_tile(B)
    grid = (pl.cdiv(B, TB),)                    # partial last block is fine (masked store)

    bf16 = jnp.bfloat16
    f32 = jnp.float32

    # Small one-time operands: pre-transposed, zero-padded, bf16; biases stay f32.
    w1t = jnp.zeros((F_in, H_pad), bf16).at[:, :Hf].set(params["w1"].T.astype(bf16))
    w3t = jnp.zeros((H_pad, H_pad), bf16).at[:Hf, :Hf].set(params["w3"].T.astype(bf16))
    w2t = jnp.zeros((H_pad, N_pad), bf16).at[:Hf, :Nf].set(params["w2"].T.astype(bf16))
    b1 = jnp.zeros((1, H_pad), f32).at[0, :Hf].set(params["b1"])
    b3 = jnp.zeros((1, H_pad), f32).at[0, :Hf].set(params["b3"])
    b2 = jnp.zeros((1, N_pad), f32).at[0, :Nf].set(params["b2"])

    out = pl.pallas_call(
        mlp_kernel,
        out_shape=jax.ShapeDtypeStruct((B, N_pad), bf16),
        grid=grid,
        in_specs=[
            pl.BlockSpec((TB, F_in), lambda i: (i, 0)),      # x tile (pipelined, f32)
            pl.BlockSpec((F_in, H_pad), lambda i: (0, 0)),   # w1 (resident)
            pl.BlockSpec((1, H_pad), lambda i: (0, 0)),      # b1
            pl.BlockSpec((H_pad, H_pad), lambda i: (0, 0)),  # w3
            pl.BlockSpec((1, H_pad), lambda i: (0, 0)),      # b3
            pl.BlockSpec((H_pad, N_pad), lambda i: (0, 0)),  # w2
            pl.BlockSpec((1, N_pad), lambda i: (0, 0)),      # b2
        ],
        out_specs=pl.BlockSpec((TB, N_pad), lambda i: (i, 0)),
        compiler_params=pltpu.CompilerParams(
            dimension_semantics=("parallel",),
            vmem_limit_bytes=32 * 1024 * 1024),
    )(x2d, w1t, b1, w3t, b3, w2t, b2)

    # Slice padded output lanes back to the logical width; return f32 like the module.
    return out[:, :Nf].astype(f32)


def init_params(key, in_features, hidden_features, out_features):
    ks = jax.random.split(key, 6)

    def u(k, shape, fan_in):
        bound = 1.0 / jnp.sqrt(fan_in)
        return jax.random.uniform(k, shape, jnp.float32, -bound, bound)

    return {
        "w1": u(ks[0], (hidden_features, in_features), in_features),
        "b1": u(ks[1], (hidden_features,), in_features),
        "w3": u(ks[2], (hidden_features, hidden_features), hidden_features),
        "b3": u(ks[3], (hidden_features,), hidden_features),
        "w2": u(ks[4], (out_features, hidden_features), hidden_features),
        "b2": u(ks[5], (out_features,), hidden_features),
    }


def reference_forward(x, params):
    B = x.shape[0]
    h = x.reshape(B, -1)
    h = jnp.maximum(h @ params["w1"].T + params["b1"], 0.0)
    h = jnp.maximum(h @ params["w3"].T + params["b3"], 0.0)
    return jnp.tanh(h @ params["w2"].T + params["b2"])


if __name__ == "__main__":
    key = jax.random.PRNGKey(0)
    kx, kp = jax.random.split(key)

    # config: in_features = C*H*W = 4*16*16 = 1024, hidden_features=32, out_features=8
    B, C, H, W = 2, 4, 16, 16
    in_features, hidden_features, out_features = C * H * W, 32, 8

    x = jax.random.normal(kx, (B, C, H, W), jnp.float32)
    params = init_params(kp, in_features, hidden_features, out_features)

    out = simple_net_forward(x, params)
    out = jax.block_until_ready(out)

    ref = reference_forward(x, params)
    assert out.shape == (B, out_features)
    # bf16 MXU operands + bf16 output store (f32 accumulation) -> loosened tolerance
    # vs the pure-f32 reference.
    assert jnp.allclose(out, ref, atol=2e-2, rtol=2e-2), float(jnp.max(jnp.abs(out - ref)))
    print("KERNEL_OK")
</pallas_src>

<mosaic_0001>
module attributes {stable_mosaic.version = 11 : i64} {
  func.func @mlp_kernel(%arg0: i32, %arg1: memref<2x1024xf32, #tpu.memory_space<vmem>>, %arg2: memref<1024x128xbf16, #tpu.memory_space<vmem>>, %arg3: memref<1x128xf32, #tpu.memory_space<vmem>>, %arg4: memref<128x128xbf16, #tpu.memory_space<vmem>>, %arg5: memref<1x128xf32, #tpu.memory_space<vmem>>, %arg6: memref<128x128xbf16, #tpu.memory_space<vmem>>, %arg7: memref<1x128xf32, #tpu.memory_space<vmem>>, %arg8: memref<2x128xbf16, #tpu.memory_space<vmem>>) attributes {dimension_semantics = [#tpu.dimension_semantics<parallel>], iteration_bounds = array<i64: 1>, scalar_prefetch = 0 : i64, scratch_operands = 0 : i64, tpu.core_type = #tpu.core_type<tc>, window_params = [{transform_indices = @transform_0, window_bounds = array<i64: 2, 1024>}, {pipeline_mode = #tpu.pipeline_mode<synchronous>, transform_indices = @transform_1, window_bounds = array<i64: 1024, 128>}, {pipeline_mode = #tpu.pipeline_mode<synchronous>, transform_indices = @transform_2, window_bounds = array<i64: 1, 128>}, {pipeline_mode = #tpu.pipeline_mode<synchronous>, transform_indices = @transform_3, window_bounds = array<i64: 128, 128>}, {pipeline_mode = #tpu.pipeline_mode<synchronous>, transform_indices = @transform_4, window_bounds = array<i64: 1, 128>}, {pipeline_mode = #tpu.pipeline_mode<synchronous>, transform_indices = @transform_5, window_bounds = array<i64: 128, 128>}, {pipeline_mode = #tpu.pipeline_mode<synchronous>, transform_indices = @transform_6, window_bounds = array<i64: 1, 128>}, {transform_indices = @transform_7, window_bounds = array<i64: 2, 128>}]} {
    %c0 = arith.constant 0 : index
    %c0_0 = arith.constant 0 : index
    %0 = vector.load %arg1[%c0, %c0_0] : memref<2x1024xf32, #tpu.memory_space<vmem>>, vector<2x1024xf32>
    %1 = arith.truncf %0 : vector<2x1024xf32> to vector<2x1024xbf16>
    %c0_1 = arith.constant 0 : index
    %c0_2 = arith.constant 0 : index
    %2 = vector.load %arg2[%c0_1, %c0_2] : memref<1024x128xbf16, #tpu.memory_space<vmem>>, vector<1024x128xbf16>
    %cst = arith.constant dense<0.000000e+00> : vector<2x128xf32>
    %3 = tpu.matmul %1, %2, %cst {dimension_numbers = #tpu.dot_dimension_numbers<[1], [0], [0], [1], [0, 0, 1, 1], [], []>} : vector<2x1024xbf16>, vector<1024x128xbf16>, vector<2x128xf32> -> vector<2x128xf32>
    %c0_3 = arith.constant 0 : index
    %c0_4 = arith.constant 0 : index
    %4 = vector.load %arg3[%c0_3, %c0_4] : memref<1x128xf32, #tpu.memory_space<vmem>>, vector<1x128xf32>
    %5 = vector.broadcast %4 : vector<1x128xf32> to vector<2x128xf32>
    %6 = arith.addf %3, %5 : vector<2x128xf32>
    %cst_5 = arith.constant 0.000000e+00 : f32
    %7 = vector.broadcast %cst_5 : f32 to vector<2x128xf32>
    %8 = arith.maximumf %6, %7 : vector<2x128xf32>
    %9 = arith.truncf %8 : vector<2x128xf32> to vector<2x128xbf16>
    %c0_6 = arith.constant 0 : index
    %c0_7 = arith.constant 0 : index
    %10 = vector.load %arg4[%c0_6, %c0_7] : memref<128x128xbf16, #tpu.memory_space<vmem>>, vector<128x128xbf16>
    %cst_8 = arith.constant dense<0.000000e+00> : vector<2x128xf32>
    %11 = tpu.matmul %9, %10, %cst_8 {dimension_numbers = #tpu.dot_dimension_numbers<[1], [0], [0], [1], [0, 0, 1, 1], [], []>} : vector<2x128xbf16>, vector<128x128xbf16>, vector<2x128xf32> -> vector<2x128xf32>
    %c0_9 = arith.constant 0 : index
    %c0_10 = arith.constant 0 : index
    %12 = vector.load %arg5[%c0_9, %c0_10] : memref<1x128xf32, #tpu.memory_space<vmem>>, vector<1x128xf32>
    %13 = vector.broadcast %12 : vector<1x128xf32> to vector<2x128xf32>
    %14 = arith.addf %11, %13 : vector<2x128xf32>
    %cst_11 = arith.constant 0.000000e+00 : f32
    %15 = vector.broadcast %cst_11 : f32 to vector<2x128xf32>
    %16 = arith.maximumf %14, %15 : vector<2x128xf32>
    %17 = arith.truncf %16 : vector<2x128xf32> to vector<2x128xbf16>
    %c0_12 = arith.constant 0 : index
    %c0_13 = arith.constant 0 : index
    %18 = vector.load %arg6[%c0_12, %c0_13] : memref<128x128xbf16, #tpu.memory_space<vmem>>, vector<128x128xbf16>
    %cst_14 = arith.constant dense<0.000000e+00> : vector<2x128xf32>
    %19 = tpu.matmul %17, %18, %cst_14 {dimension_numbers = #tpu.dot_dimension_numbers<[1], [0], [0], [1], [0, 0, 1, 1], [], []>} : vector<2x128xbf16>, vector<128x128xbf16>, vector<2x128xf32> -> vector<2x128xf32>
    %c0_15 = arith.constant 0 : index
    %c0_16 = arith.constant 0 : index
    %20 = vector.load %arg7[%c0_15, %c0_16] : memref<1x128xf32, #tpu.memory_space<vmem>>, vector<1x128xf32>
    %21 = vector.broadcast %20 : vector<1x128xf32> to vector<2x128xf32>
    %22 = arith.addf %19, %21 : vector<2x128xf32>
    %23 = math.tanh %22 : vector<2x128xf32>
    %24 = arith.truncf %23 : vector<2x128xf32> to vector<2x128xbf16>
    %c0_17 = arith.constant 0 : index
    %c0_18 = arith.constant 0 : index
    %25 = vector.load %arg8[%c0_17, %c0_18] : memref<2x128xbf16, #tpu.memory_space<vmem>>, vector<2x128xbf16>
    tpu.vector_store %arg8[%c0_17, %c0_18], %24 {strides = array<i32>} : memref<2x128xbf16, #tpu.memory_space<vmem>>, vector<2x128xbf16>,
    return
  }
  func.func @transform_0(%arg0: i32) -> (i32, i32) {
    %c0_i32 = arith.constant 0 : i32
    %c0_i32_0 = arith.constant 0 : i32
    return %arg0, %c0_i32 : i32, i32
  }
  func.func @transform_1(%arg0: i32) -> (i32, i32) {
    %c0_i32 = arith.constant 0 : i32
    %c0_i32_0 = arith.constant 0 : i32
    %c0_i32_1 = arith.constant 0 : i32
    return %c0_i32, %c0_i32_0 : i32, i32
  }
  func.func @transform_2(%arg0: i32) -> (i32, i32) {
    %c0_i32 = arith.constant 0 : i32
    %c0_i32_0 = arith.constant 0 : i32
    %c0_i32_1 = arith.constant 0 : i32
    return %c0_i32, %c0_i32_0 : i32, i32
  }
  func.func @transform_3(%arg0: i32) -> (i32, i32) {
    %c0_i32 = arith.constant 0 : i32
    %c0_i32_0 = arith.constant 0 : i32
    %c0_i32_1 = arith.constant 0 : i32
    return %c0_i32, %c0_i32_0 : i32, i32
  }
  func.func @transform_4(%arg0: i32) -> (i32, i32) {
    %c0_i32 = arith.constant 0 : i32
    %c0_i32_0 = arith.constant 0 : i32
    %c0_i32_1 = arith.constant 0 : i32
    return %c0_i32, %c0_i32_0 : i32, i32
  }
  func.func @transform_5(%arg0: i32) -> (i32, i32) {
    %c0_i32 = arith.constant 0 : i32
    %c0_i32_0 = arith.constant 0 : i32
    %c0_i32_1 = arith.constant 0 : i32
    return %c0_i32, %c0_i32_0 : i32, i32
  }
  func.func @transform_6(%arg0: i32) -> (i32, i32) {
    %c0_i32 = arith.constant 0 : i32
    %c0_i32_0 = arith.constant 0 : i32
    %c0_i32_1 = arith.constant 0 : i32
    return %c0_i32, %c0_i32_0 : i32, i32
  }
  func.func @transform_7(%arg0: i32) -> (i32, i32) {
    %c0_i32 = arith.constant 0 : i32
    %c0_i32_0 = arith.constant 0 : i32
    return %arg0, %c0_i32 : i32, i32
  }
}

</mosaic_0001>

<llo_original>
// kernel: tpu_custom_call.1
$region0: #{tpu_custom_call.1}
  #allocation0 [shape = 'u32[]', space=smem, size = 0x4, offset = 0x4, fixed_abs, tag = 'smem constant byte address 0x4 - core index']
  #allocation1 [shape = 'u32[72,128]{1,0:T(1,128)}', space=vmem, size = 0x9000, scoped, tag = 'internal scratch']
  %s0 = inlined_call_operand.hbm [shape: f32[2,1024], index: 0, kind: input, shape index: {}]
  %s1 = inlined_call_operand.hbm [shape: bf16[1024,128], index: 1, kind: input, shape index: {}]
  %s2 = inlined_call_operand.vmem [shape: f32[1,128], index: 2, kind: input, shape index: {}]
  %s3 = inlined_call_operand.hbm [shape: bf16[128,128], index: 3, kind: input, shape index: {}]
  %s4 = inlined_call_operand.vmem [shape: f32[1,128], index: 4, kind: input, shape index: {}]
  %s5 = inlined_call_operand.hbm [shape: bf16[128,128], index: 5, kind: input, shape index: {}]
  %s6 = inlined_call_operand.vmem [shape: f32[1,128], index: 6, kind: input, shape index: {}]
  %s7 = inlined_call_operand.hbm [shape: bf16[2,128], index: 7, kind: output, shape index: {}]
  %s8 = sld [smem:[#allocation0]]
  $region54: #{tpu_custom_call.1} parent=0
    _
  %s10 = ssub.s32 1, %s8
  %s11 = scalar_select 0, %s10, %s8
  $region1: #{tpu_custom_call.1} parent=0
    #allocation2 [shape = 'u8[8192]{0}', space=vmem, size = 0x2000, scoped, tag = 'input window, operand 0, single buffered']
    #allocation3 [shape = 's32[1]{0}', space=sflag, size = 0x4, scoped, tag = 'scoped memory for tpu_custom_call.1']
    #allocation4 [shape = 's32[1]{0}', space=sflag, size = 0x4, scoped, tag = 'scoped memory for tpu_custom_call.1']
    #allocation5 [shape = 'u8[262144]{0}', space=vmem, size = 0x40000, scoped, tag = 'input window, operand 1, single buffered']
    #allocation6 [shape = 's32[1]{0}', space=sflag, size = 0x4, scoped, tag = 'scoped memory for tpu_custom_call.1']
    #allocation7 [shape = 'u8[32768]{0}', space=vmem, size = 0x8000, scoped, tag = 'input window, operand 3, single buffered']
    #allocation8 [shape = 'u8[32768]{0}', space=vmem, size = 0x8000, scoped, tag = 'input window, operand 5, single buffered']
    #allocation9 [shape = 's32[1]{0}', space=sflag, size = 0x4, scoped, tag = 'scoped memory for tpu_custom_call.1']
    #allocation10 [shape = 'u8[512]{0}', space=vmem, size = 0x400, scoped, tag = 'output window, operand 0, single buffered']
    %12 = vsyncpa [#allocation3], 0
    %13 = vsyncpa [#allocation6], 0
    %14 = vsyncpa [#allocation9], 0
    %15 = vsyncpa [#allocation4], 0
    // Predicated region
    $region2: #{tpu_custom_call.1} parent=1 // pred_check
      _
    $region3: #{tpu_custom_call.1} parent=1 // pred_check_branch
      %17 = sbr.rel (0) target = $region5
    $region4: #{tpu_custom_call.1} parent=1 // pred_region
      %19 = vsyncadd [#allocation3], 0
      %s21 = sshll.u32 %s0, 4
      %s22 = int_to_ptr.hbm [resolvable:$true] %s21
      %s23 = sshll.u32 [#allocation2], 4
      %s24 = int_to_ptr.vmem [resolvable:$true] %s23
      %26 = dma.hbm_to_vmem [thread:$0]  %s22, 256, %s24, [#allocation3]
    $region5: #{tpu_custom_call.1} parent=1 // pred_fallthru
      _
    // Predicated region
    $region6: #{tpu_custom_call.1} parent=1 // pred_check
      _
    $region7: #{tpu_custom_call.1} parent=1 // pred_check_branch
      %28 = sbr.rel (0) target = $region9
    $region8: #{tpu_custom_call.1} parent=1 // pred_region
      %30 = vsyncadd [#allocation6], 0
      %s31 = sshll.u32 %s1, 4
      %s32 = int_to_ptr.hbm [resolvable:$true] %s31
      %s33 = sshll.u32 [#allocation5], 4
      %s34 = int_to_ptr.vmem [resolvable:$true] %s33
      %39 = dma.hbm_to_vmem [thread:$0]  %s32, 8192, %s34, [#allocation6], 64, 64, 4
    $region9: #{tpu_custom_call.1} parent=1 // pred_fallthru
      _
    // Predicated region
    $region10: #{tpu_custom_call.1} parent=1 // pred_check
      _
    $region11: #{tpu_custom_call.1} parent=1 // pred_check_branch
      %41 = sbr.rel (0) target = $region13
    $region12: #{tpu_custom_call.1} parent=1 // pred_region
      _
    $region13: #{tpu_custom_call.1} parent=1 // pred_fallthru
      _
    // Predicated region
    $region14: #{tpu_custom_call.1} parent=1 // pred_check
      _
    $region15: #{tpu_custom_call.1} parent=1 // pred_check_branch
      %43 = sbr.rel (0) target = $region17
    $region16: #{tpu_custom_call.1} parent=1 // pred_region
      %45 = vsyncadd [#allocation6], 0
      %s46 = sshll.u32 %s3, 4
      %s47 = int_to_ptr.hbm [resolvable:$true] %s46
      %s48 = sshll.u32 [#allocation7], 4
      %s49 = int_to_ptr.vmem [resolvable:$true] %s48
      %54 = dma.hbm_to_vmem [thread:$0]  %s47, 1024, %s49, [#allocation6], 64, 64, 4
    $region17: #{tpu_custom_call.1} parent=1 // pred_fallthru
      _
    // Predicated region
    $region18: #{tpu_custom_call.1} parent=1 // pred_check
      _
    $region19: #{tpu_custom_call.1} parent=1 // pred_check_branch
      %56 = sbr.rel (0) target = $region21
    $region20: #{tpu_custom_call.1} parent=1 // pred_region
      _
    $region21: #{tpu_custom_call.1} parent=1 // pred_fallthru
      _
    // Predicated region
    $region22: #{tpu_custom_call.1} parent=1 // pred_check
      _
    $region23: #{tpu_custom_call.1} parent=1 // pred_check_branch
      %58 = sbr.rel (0) target = $region25
    $region24: #{tpu_custom_call.1} parent=1 // pred_region
      %60 = vsyncadd [#allocation9], 0
      %s61 = sshll.u32 %s5, 4
      %s62 = int_to_ptr.hbm [resolvable:$true] %s61
      %s63 = sshll.u32 [#allocation8], 4
      %s64 = int_to_ptr.vmem [resolvable:$true] %s63
      %69 = dma.hbm_to_vmem [thread:$0]  %s62, 1024, %s64, [#allocation9], 64, 64, 4
    $region25: #{tpu_custom_call.1} parent=1 // pred_fallthru
      _
    // Predicated region
    $region26: #{tpu_custom_call.1} parent=1 // pred_check
      _
    $region27: #{tpu_custom_call.1} parent=1 // pred_check_branch
      %71 = sbr.rel (0) target = $region29
    $region28: #{tpu_custom_call.1} parent=1 // pred_region
      _
    $region29: #{tpu_custom_call.1} parent=1 // pred_fallthru
      _
    // Predicated region
    $region30: #{tpu_custom_call.1} parent=1 // pred_check
      _
    $region31: #{tpu_custom_call.1} parent=1 // pred_check_branch
      %73 = sbr.rel (0) target = $region33
    $region32: #{tpu_custom_call.1} parent=1 // pred_region
      %75 = dma.done [#allocation3], 256
    $region33: #{tpu_custom_call.1} parent=1 // pred_fallthru
      _
    // Predicated region
    $region34: #{tpu_custom_call.1} parent=1 // pred_check
      _
    $region35: #{tpu_custom_call.1} parent=1 // pred_check_branch
      %77 = sbr.rel (0) target = $region37
    $region36: #{tpu_custom_call.1} parent=1 // pred_region
      %79 = dma.done [#allocation6], 8192
    $region37: #{tpu_custom_call.1} parent=1 // pred_fallthru
      _
    // Predicated region
    $region38: #{tpu_custom_call.1} parent=1 // pred_check
      _
    $region39: #{tpu_custom_call.1} parent=1 // pred_check_branch
      %81 = sbr.rel (0) target = $region41
    $region40: #{tpu_custom_call.1} parent=1 // pred_region
      %83 = dma.done [#allocation6], 1024
    $region41: #{tpu_custom_call.1} parent=1 // pred_fallthru
      _
    // Predicated region
    $region42: #{tpu_custom_call.1} parent=1 // pred_check
      _
    $region43: #{tpu_custom_call.1} parent=1 // pred_check_branch
      %85 = sbr.rel (0) target = $region45
    $region44: #{tpu_custom_call.1} parent=1 // pred_region
      %87 = dma.done [#allocation9], 1024
    $region45: #{tpu_custom_call.1} parent=1 // pred_fallthru
      _
    %v88 = vld [vmem:[#allocation2] sm:$0xff]
    %v89 = vld [vmem:[#allocation2 + $0x8] sm:$0xff]
    %92 = vst [vmem:[#allocation1] ss:$4 sm:$0xff] %v88
    %s93 = scalar_lea.vmem [#allocation1], 32
    %94 = vst [vmem:[%s93] ss:$4 sm:$0xff] %v89
    %v95 = vld.sshfl [vmem:[#allocation1] sm:$0xff pattern:$0x73625140]
    %v96 = vld.sshfl [vmem:[#allocation1 + $0x8] sm:$0xff pattern:$0x73625140]
    %v97 = vld.sshfl [vmem:[#allocation1 + $0x10] sm:$0xff pattern:$0x73625140]
    %v98 = vld.sshfl [vmem:[#allocation1 + $0x18] sm:$0xff pattern:$0x73625140]
    %v99 = vld.sshfl [vmem:[#allocation1 + $0x20] sm:$0xff pattern:$0x73625140]
    %v100 = vld.sshfl [vmem:[#allocation1 + $0x28] sm:$0xff pattern:$0x73625140]
    %v101 = vld.sshfl [vmem:[#allocation1 + $0x30] sm:$0xff pattern:$0x73625140]
    %v102 = vld.sshfl [vmem:[#allocation1 + $0x38] sm:$0xff pattern:$0x73625140]
    %v111 = vpack.c.bf16 %v95, %v95
    %v112 = vpack.c.bf16 %v96, %v96
    %v113 = vpack.c.bf16 %v97, %v97
    %v114 = vpack.c.bf16 %v98, %v98
    %v115 = vpack.c.bf16 %v99, %v99
    %v116 = vpack.c.bf16 %v100, %v100
    %v117 = vpack.c.bf16 %v101, %v101
    %v118 = vpack.c.bf16 %v102, %v102
    %v119 = vld [vmem:[#allocation5] sm:$0xf]
    %v120 = vld [vmem:[#allocation5 + $0x4] sm:$0xf]
    %v121 = vld [vmem:[#allocation5 + $0x8] sm:$0xf]
    %v122 = vld [vmem:[#allocation5 + $0xc] sm:$0xf]
    %v123 = vld [vmem:[#allocation5 + $0x10] sm:$0xf]
    %v124 = vld [vmem:[#allocation5 + $0x14] sm:$0xf]
    %v125 = vld [vmem:[#allocation5 + $0x18] sm:$0xf]
    %v126 = vld [vmem:[#allocation5 + $0x1c] sm:$0xf]
    %v127 = vld [vmem:[#allocation5 + $0x20] sm:$0xf]
    %v128 = vld [vmem:[#allocation5 + $0x24] sm:$0xf]
    %v129 = vld [vmem:[#allocation5 + $0x28] sm:$0xf]
    %v130 = vld [vmem:[#allocation5 + $0x2c] sm:$0xf]
    %v131 = vld [vmem:[#allocation5 + $0x30] sm:$0xf]
    %v132 = vld [vmem:[#allocation5 + $0x34] sm:$0xf]
    %v133 = vld [vmem:[#allocation5 + $0x38] sm:$0xf]
    %v134 = vld [vmem:[#allocation5 + $0x3c] sm:$0xf]
    %v135 = vld [vmem:[#allocation5 + $0x40] sm:$0xf]
    %v136 = vld [vmem:[#allocation5 + $0x44] sm:$0xf]
    %v137 = vld [vmem:[#allocation5 + $0x48] sm:$0xf]
    %v138 = vld [vmem:[#allocation5 + $0x4c] sm:$0xf]
    %v139 = vld [vmem:[#allocation5 + $0x50] sm:$0xf]
    %v140 = vld [vmem:[#allocation5 + $0x54] sm:$0xf]
    %v141 = vld [vmem:[#allocation5 + $0x58] sm:$0xf]
    %v142 = vld [vmem:[#allocation5 + $0x5c] sm:$0xf]
    %v143 = vld [vmem:[#allocation5 + $0x60] sm:$0xf]
    %v144 = vld [vmem:[#allocation5 + $0x64] sm:$0xf]
    %v145 = vld [vmem:[#allocation5 + $0x68] sm:$0xf]
    %v146 = vld [vmem:[#allocation5 + $0x6c] sm:$0xf]
    %v147 = vld [vmem:[#allocation5 + $0x70] sm:$0xf]
    %v148 = vld [vmem:[#allocation5 + $0x74] sm:$0xf]
    %v149 = vld [vmem:[#allocation5 + $0x78] sm:$0xf]
    %v150 = vld [vmem:[#allocation5 + $0x7c] sm:$0xf]
    %v151 = vld [vmem:[#allocation5 + $0x80] sm:$0xf]
    %v152 = vld [vmem:[#allocation5 + $0x84] sm:$0xf]
    %v153 = vld [vmem:[#allocation5 + $0x88] sm:$0xf]
    %v154 = vld [vmem:[#allocation5 + $0x8c] sm:$0xf]
    %v155 = vld [vmem:[#allocation5 + $0x90] sm:$0xf]
    %v156 = vld [vmem:[#allocation5 + $0x94] sm:$0xf]
    %v157 = vld [vmem:[#allocation5 + $0x98] sm:$0xf]
    %v158 = vld [vmem:[#allocation5 + $0x9c] sm:$0xf]
    %v159 = vld [vmem:[#allocation5 + $0xa0] sm:$0xf]
    %v160 = vld [vmem:[#allocation5 + $0xa4] sm:$0xf]
    %v161 = vld [vmem:[#allocation5 + $0xa8] sm:$0xf]
    %v162 = vld [vmem:[#allocation5 + $0xac] sm:$0xf]
    %v163 = vld [vmem:[#allocation5 + $0xb0] sm:$0xf]
    %v164 = vld [vmem:[#allocation5 + $0xb4] sm:$0xf]
    %v165 = vld [vmem:[#allocation5 + $0xb8] sm:$0xf]
    %v166 = vld [vmem:[#allocation5 + $0xbc] sm:$0xf]
    %v167 = vld [vmem:[#allocation5 + $0xc0] sm:$0xf]
    %v168 = vld [vmem:[#allocation5 + $0xc4] sm:$0xf]
    %v169 = vld [vmem:[#allocation5 + $0xc8] sm:$0xf]
    %v170 = vld [vmem:[#allocation5 + $0xcc] sm:$0xf]
    %v171 = vld [vmem:[#allocation5 + $0xd0] sm:$0xf]
    %v172 = vld [vmem:[#allocation5 + $0xd4] sm:$0xf]
    %v173 = vld [vmem:[#allocation5 + $0xd8] sm:$0xf]
    %v174 = vld [vmem:[#allocation5 + $0xdc] sm:$0xf]
    %v175 = vld [vmem:[#allocation5 + $0xe0] sm:$0xf]
    %v176 = vld [vmem:[#allocation5 + $0xe4] sm:$0xf]
    %v177 = vld [vmem:[#allocation5 + $0xe8] sm:$0xf]
    %v178 = vld [vmem:[#allocation5 + $0xec] sm:$0xf]
    %v179 = vld [vmem:[#allocation5 + $0xf0] sm:$0xf]
    %v180 = vld [vmem:[#allocation5 + $0xf4] sm:$0xf]
    %v181 = vld [vmem:[#allocation5 + $0xf8] sm:$0xf]
    %v182 = vld [vmem:[#allocation5 + $0xfc] sm:$0xf]
    %v183 = vld [vmem:[#allocation5 + $0x100] sm:$0xf]
    %v184 = vld [vmem:[#allocation5 + $0x104] sm:$0xf]
    %v185 = vld [vmem:[#allocation5 + $0x108] sm:$0xf]
    %v186 = vld [vmem:[#allocation5 + $0x10c] sm:$0xf]
    %v187 = vld [vmem:[#allocation5 + $0x110] sm:$0xf]
    %v188 = vld [vmem:[#allocation5 + $0x114] sm:$0xf]
    %v189 = vld [vmem:[#allocation5 + $0x118] sm:$0xf]
    %v190 = vld [vmem:[#allocation5 + $0x11c] sm:$0xf]
    %v191 = vld [vmem:[#allocation5 + $0x120] sm:$0xf]
    %v192 = vld [vmem:[#allocation5 + $0x124] sm:$0xf]
    %v193 = vld [vmem:[#allocation5 + $0x128] sm:$0xf]
    %v194 = vld [vmem:[#allocation5 + $0x12c] sm:$0xf]
    %v195 = vld [vmem:[#allocation5 + $0x130] sm:$0xf]
    %v196 = vld [vmem:[#allocation5 + $0x134] sm:$0xf]
    %v197 = vld [vmem:[#allocation5 + $0x138] sm:$0xf]
    %v198 = vld [vmem:[#allocation5 + $0x13c] sm:$0xf]
    %v199 = vld [vmem:[#allocation5 + $0x140] sm:$0xf]
    %v200 = vld [vmem:[#allocation5 + $0x144] sm:$0xf]
    %v201 = vld [vmem:[#allocation5 + $0x148] sm:$0xf]
    %v202 = vld [vmem:[#allocation5 + $0x14c] sm:$0xf]
    %v203 = vld [vmem:[#allocation5 + $0x150] sm:$0xf]
    %v204 = vld [vmem:[#allocation5 + $0x154] sm:$0xf]
    %v205 = vld [vmem:[#allocation5 + $0x158] sm:$0xf]
    %v206 = vld [vmem:[#allocation5 + $0x15c] sm:$0xf]
    %v207 = vld [vmem:[#allocation5 + $0x160] sm:$0xf]
    %v208 = vld [vmem:[#allocation5 + $0x164] sm:$0xf]
    %v209 = vld [vmem:[#allocation5 + $0x168] sm:$0xf]
    %v210 = vld [vmem:[#allocation5 + $0x16c] sm:$0xf]
    %v211 = vld [vmem:[#allocation5 + $0x170] sm:$0xf]
    %v212 = vld [vmem:[#allocation5 + $0x174] sm:$0xf]
    %v213 = vld [vmem:[#allocation5 + $0x178] sm:$0xf]
    %v214 = vld [vmem:[#allocation5 + $0x17c] sm:$0xf]
    %v215 = vld [vmem:[#allocation5 + $0x180] sm:$0xf]
    %v216 = vld [vmem:[#allocation5 + $0x184] sm:$0xf]
    %v217 = vld [vmem:[#allocation5 + $0x188] sm:$0xf]
    %v218 = vld [vmem:[#allocation5 + $0x18c] sm:$0xf]
    %v219 = vld [vmem:[#allocation5 + $0x190] sm:$0xf]
    %v220 = vld [vmem:[#allocation5 + $0x194] sm:$0xf]
    %v221 = vld [vmem:[#allocation5 + $0x198] sm:$0xf]
    %v222 = vld [vmem:[#allocation5 + $0x19c] sm:$0xf]
    %v223 = vld [vmem:[#allocation5 + $0x1a0] sm:$0xf]
    %v224 = vld [vmem:[#allocation5 + $0x1a4] sm:$0xf]
    %v225 = vld [vmem:[#allocation5 + $0x1a8] sm:$0xf]
    %v226 = vld [vmem:[#allocation5 + $0x1ac] sm:$0xf]
    %v227 = vld [vmem:[#allocation5 + $0x1b0] sm:$0xf]
    %v228 = vld [vmem:[#allocation5 + $0x1b4] sm:$0xf]
    %v229 = vld [vmem:[#allocation5 + $0x1b8] sm:$0xf]
    %v230 = vld [vmem:[#allocation5 + $0x1bc] sm:$0xf]
    %v231 = vld [vmem:[#allocation5 + $0x1c0] sm:$0xf]
    %v232 = vld [vmem:[#allocation5 + $0x1c4] sm:$0xf]
    %v233 = vld [vmem:[#allocation5 + $0x1c8] sm:$0xf]
    %v234 = vld [vmem:[#allocation5 + $0x1cc] sm:$0xf]
    %v235 = vld [vmem:[#allocation5 + $0x1d0] sm:$0xf]
    %v236 = vld [vmem:[#allocation5 + $0x1d4] sm:$0xf]
    %v237 = vld [vmem:[#allocation5 + $0x1d8] sm:$0xf]
    %v238 = vld [vmem:[#allocation5 + $0x1dc] sm:$0xf]
    %v239 = vld [vmem:[#allocation5 + $0x1e0] sm:$0xf]
    %v240 = vld [vmem:[#allocation5 + $0x1e4] sm:$0xf]
    %v241 = vld [vmem:[#allocation5 + $0x1e8] sm:$0xf]
    %v242 = vld [vmem:[#allocation5 + $0x1ec] sm:$0xf]
    %v243 = vld [vmem:[#allocation5 + $0x1f0] sm:$0xf]
    %v244 = vld [vmem:[#allocation5 + $0x1f4] sm:$0xf]
    %v245 = vld [vmem:[#allocation5 + $0x1f8] sm:$0xf]
    %v246 = vld [vmem:[#allocation5 + $0x1fc] sm:$0xf]
    %v247 = vld [vmem:[%s2] sm:$0x1]
    %v249 = vperm.slane %v247, 0
    %v379 = vunpack.c.l.b16 %v119
    %v380 = vunpack.c.l.b16 %v120
    %v381 = vunpack.c.l.b16 %v121
    %v382 = vunpack.c.l.b16 %v122
    %v383 = vunpack.c.l.b16 %v123
    %v384 = vunpack.c.l.b16 %v124
    %v385 = vunpack.c.l.b16 %v125
    %v386 = vunpack.c.l.b16 %v126
    %v387 = vunpack.c.l.b16 %v127
    %v388 = vunpack.c.l.b16 %v128
    %v389 = vunpack.c.l.b16 %v129
    %v390 = vunpack.c.l.b16 %v130
    %v391 = vunpack.c.l.b16 %v131
    %v392 = vunpack.c.l.b16 %v132
    %v393 = vunpack.c.l.b16 %v133
    %v394 = vunpack.c.l.b16 %v134
    %v395 = vunpack.c.l.b16 %v135
    %v396 = vunpack.c.l.b16 %v136
    %v397 = vunpack.c.l.b16 %v137
    %v398 = vunpack.c.l.b16 %v138
    %v399 = vunpack.c.l.b16 %v139
    %v400 = vunpack.c.l.b16 %v140
    %v401 = vunpack.c.l.b16 %v141
    %v402 = vunpack.c.l.b16 %v142
    %v403 = vunpack.c.l.b16 %v143
    %v404 = vunpack.c.l.b16 %v144
    %v405 = vunpack.c.l.b16 %v145
    %v406 = vunpack.c.l.b16 %v146
    %v407 = vunpack.c.l.b16 %v147
    %v408 = vunpack.c.l.b16 %v148
    %v409 = vunpack.c.l.b16 %v149
    %v410 = vunpack.c.l.b16 %v150
    %v411 = vunpack.c.l.b16 %v151
    %v412 = vunpack.c.l.b16 %v152
    %v413 = vunpack.c.l.b16 %v153
    %v414 = vunpack.c.l.b16 %v154
    %v415 = vunpack.c.l.b16 %v155
    %v416 = vunpack.c.l.b16 %v156
    %v417 = vunpack.c.l.b16 %v157
    %v418 = vunpack.c.l.b16 %v158
    %v419 = vunpack.c.l.b16 %v159
    %v420 = vunpack.c.l.b16 %v160
    %v421 = vunpack.c.l.b16 %v161
    %v422 = vunpack.c.l.b16 %v162
    %v423 = vunpack.c.l.b16 %v163
    %v424 = vunpack.c.l.b16 %v164
    %v425 = vunpack.c.l.b16 %v165
    %v426 = vunpack.c.l.b16 %v166
    %v427 = vunpack.c.l.b16 %v167
    %v428 = vunpack.c.l.b16 %v168
    %v429 = vunpack.c.l.b16 %v169
    %v430 = vunpack.c.l.b16 %v170
    %v431 = vunpack.c.l.b16 %v171
    %v432 = vunpack.c.l.b16 %v172
    %v433 = vunpack.c.l.b16 %v173
    %v434 = vunpack.c.l.b16 %v174
    %v435 = vunpack.c.l.b16 %v175
    %v436 = vunpack.c.l.b16 %v176
    %v437 = vunpack.c.l.b16 %v177
    %v438 = vunpack.c.l.b16 %v178
    %v439 = vunpack.c.l.b16 %v179
    %v440 = vunpack.c.l.b16 %v180
    %v441 = vunpack.c.l.b16 %v181
    %v442 = vunpack.c.l.b16 %v182
    %v443 = vunpack.c.l.b16 %v183
    %v444 = vunpack.c.l.b16 %v184
    %v445 = vunpack.c.l.b16 %v185
    %v446 = vunpack.c.l.b16 %v186
    %v447 = vunpack.c.l.b16 %v187
    %v448 = vunpack.c.l.b16 %v188
    %v449 = vunpack.c.l.b16 %v189
    %v450 = vunpack.c.l.b16 %v190
    %v451 = vunpack.c.l.b16 %v191
    %v452 = vunpack.c.l.b16 %v192
    %v453 = vunpack.c.l.b16 %v193
    %v454 = vunpack.c.l.b16 %v194
    %v455 = vunpack.c.l.b16 %v195
    %v456 = vunpack.c.l.b16 %v196
    %v457 = vunpack.c.l.b16 %v197
    %v458 = vunpack.c.l.b16 %v198
    %v459 = vunpack.c.l.b16 %v199
    %v460 = vunpack.c.l.b16 %v200
    %v461 = vunpack.c.l.b16 %v201
    %v462 = vunpack.c.l.b16 %v202
    %v463 = vunpack.c.l.b16 %v203
    %v464 = vunpack.c.l.b16 %v204
    %v465 = vunpack.c.l.b16 %v205
    %v466 = vunpack.c.l.b16 %v206
    %v467 = vunpack.c.l.b16 %v207
    %v468 = vunpack.c.l.b16 %v208
    %v469 = vunpack.c.l.b16 %v209
    %v470 = vunpack.c.l.b16 %v210
    %v471 = vunpack.c.l.b16 %v211
    %v472 = vunpack.c.l.b16 %v212
    %v473 = vunpack.c.l.b16 %v213
    %v474 = vunpack.c.l.b16 %v214
    %v475 = vunpack.c.l.b16 %v215
    %v476 = vunpack.c.l.b16 %v216
    %v477 = vunpack.c.l.b16 %v217
    %v478 = vunpack.c.l.b16 %v218
    %v479 = vunpack.c.l.b16 %v219
    %v480 = vunpack.c.l.b16 %v220
    %v481 = vunpack.c.l.b16 %v221
    %v482 = vunpack.c.l.b16 %v222
    %v483 = vunpack.c.l.b16 %v223
    %v484 = vunpack.c.l.b16 %v224
    %v485 = vunpack.c.l.b16 %v225
    %v486 = vunpack.c.l.b16 %v226
    %v487 = vunpack.c.l.b16 %v227
    %v488 = vunpack.c.l.b16 %v228
    %v489 = vunpack.c.l.b16 %v229
    %v490 = vunpack.c.l.b16 %v230
    %v491 = vunpack.c.l.b16 %v231
    %v492 = vunpack.c.l.b16 %v232
    %v493 = vunpack.c.l.b16 %v233
    %v494 = vunpack.c.l.b16 %v234
    %v495 = vunpack.c.l.b16 %v235
    %v496 = vunpack.c.l.b16 %v236
    %v497 = vunpack.c.l.b16 %v237
    %v498 = vunpack.c.l.b16 %v238
    %v499 = vunpack.c.l.b16 %v239
    %v500 = vunpack.c.l.b16 %v240
    %v501 = vunpack.c.l.b16 %v241
    %v502 = vunpack.c.l.b16 %v242
    %v503 = vunpack.c.l.b16 %v243
    %v504 = vunpack.c.l.b16 %v244
    %v505 = vunpack.c.l.b16 %v245
    %v506 = vunpack.c.l.b16 %v246
    %v507 = vpack.c.b16 %v380, %v379
    %v508 = vpack.c.b16 %v382, %v381
    %v509 = vpack.c.b16 %v384, %v383
    %v510 = vpack.c.b16 %v386, %v385
    %v511 = vpack.c.b16 %v388, %v387
    %v512 = vpack.c.b16 %v390, %v389
    %v513 = vpack.c.b16 %v392, %v391
    %v514 = vpack.c.b16 %v394, %v393
    %v515 = vpack.c.b16 %v396, %v395
    %v516 = vpack.c.b16 %v398, %v397
    %v517 = vpack.c.b16 %v400, %v399
    %v518 = vpack.c.b16 %v402, %v401
    %v519 = vpack.c.b16 %v404, %v403
    %v520 = vpack.c.b16 %v406, %v405
    %v521 = vpack.c.b16 %v408, %v407
    %v522 = vpack.c.b16 %v410, %v409
    %v523 = vpack.c.b16 %v412, %v411
    %v524 = vpack.c.b16 %v414, %v413
    %v525 = vpack.c.b16 %v416, %v415
    %v526 = vpack.c.b16 %v418, %v417
    %v527 = vpack.c.b16 %v420, %v419
    %v528 = vpack.c.b16 %v422, %v421
    %v529 = vpack.c.b16 %v424, %v423
    %v530 = vpack.c.b16 %v426, %v425
    %v531 = vpack.c.b16 %v428, %v427
    %v532 = vpack.c.b16 %v430, %v429
    %v533 = vpack.c.b16 %v432, %v431
    %v534 = vpack.c.b16 %v434, %v433
    %v535 = vpack.c.b16 %v436, %v435
    %v536 = vpack.c.b16 %v438, %v437
    %v537 = vpack.c.b16 %v440, %v439
    %v538 = vpack.c.b16 %v442, %v441
    %v539 = vpack.c.b16 %v444, %v443
    %v540 = vpack.c.b16 %v446, %v445
    %v541 = vpack.c.b16 %v448, %v447
    %v542 = vpack.c.b16 %v450, %v449
    %v543 = vpack.c.b16 %v452, %v451
    %v544 = vpack.c.b16 %v454, %v453
    %v545 = vpack.c.b16 %v456, %v455
    %v546 = vpack.c.b16 %v458, %v457
    %v547 = vpack.c.b16 %v460, %v459
    %v548 = vpack.c.b16 %v462, %v461
    %v549 = vpack.c.b16 %v464, %v463
    %v550 = vpack.c.b16 %v466, %v465
    %v551 = vpack.c.b16 %v468, %v467
    %v552 = vpack.c.b16 %v470, %v469
    %v553 = vpack.c.b16 %v472, %v471
    %v554 = vpack.c.b16 %v474, %v473
    %v555 = vpack.c.b16 %v476, %v475
    %v556 = vpack.c.b16 %v478, %v477
    %v557 = vpack.c.b16 %v480, %v479
    %v558 = vpack.c.b16 %v482, %v481
    %v559 = vpack.c.b16 %v484, %v483
    %v560 = vpack.c.b16 %v486, %v485
    %v561 = vpack.c.b16 %v488, %v487
    %v562 = vpack.c.b16 %v490, %v489
    %v563 = vpack.c.b16 %v492, %v491
    %v564 = vpack.c.b16 %v494, %v493
    %v565 = vpack.c.b16 %v496, %v495
    %v566 = vpack.c.b16 %v498, %v497
    %v567 = vpack.c.b16 %v500, %v499
    %v568 = vpack.c.b16 %v502, %v501
    %v569 = vpack.c.b16 %v504, %v503
    %v570 = vpack.c.b16 %v506, %v505
    %635 = vmatpush.bf16.msra.mxu0 %v514
    %636 = vmatpush.bf16.msra.mxu0 %v513
    %637 = vmatpush.bf16.msra.mxu0 %v512
    %638 = vmatpush.bf16.msra.mxu0 %v511
    %639 = vmatpush.bf16.msra.mxu0 %v510
    %640 = vmatpush.bf16.msra.mxu0 %v509
    %641 = vmatpush.bf16.msra.mxu0 %v508
    %642 = vmatpush.bf16.msra.mxu0 %v507
    %643 = vmatmul.bf16.gmra.mxu0 %v111
    %v644 = vpop.f32.mrf.mxu0
    %v645 = vadd.f32 %v249, %v644
    %v646 = vpop.f32.mrf.mxu0
    %647 = vdwg.mxu0
    %648 = vmatpush.bf16.msra.mxu0 %v522
    %649 = vmatpush.bf16.msra.mxu0 %v521
    %650 = vmatpush.bf16.msra.mxu0 %v520
    %651 = vmatpush.bf16.msra.mxu0 %v519
    %652 = vmatpush.bf16.msra.mxu0 %v518
    %653 = vmatpush.bf16.msra.mxu0 %v517
    %654 = vmatpush.bf16.msra.mxu0 %v516
    %655 = vmatpush.bf16.msra.mxu0 %v515
    %656 = vmatmul.bf16.gmra.mxu0 %v112
    %v657 = vpop.f32.mrf.mxu0
    %v658 = vadd.f32 %v645, %v657
    %v659 = vpop.f32.mrf.mxu0
    %660 = vdwg.mxu0
    %661 = vmatpush.bf16.msra.mxu0 %v530
    %662 = vmatpush.bf16.msra.mxu0 %v529
    %663 = vmatpush.bf16.msra.mxu0 %v528
    %664 = vmatpush.bf16.msra.mxu0 %v527
    %665 = vmatpush.bf16.msra.mxu0 %v526
    %666 = vmatpush.bf16.msra.mxu0 %v525
    %667 = vmatpush.bf16.msra.mxu0 %v524
    %668 = vmatpush.bf16.msra.mxu0 %v523
    %669 = vmatmul.bf16.gmra.mxu0 %v113
    %v670 = vpop.f32.mrf.mxu0
    %v671 = vadd.f32 %v658, %v670
    %v672 = vpop.f32.mrf.mxu0
    %673 = vdwg.mxu0
    %674 = vmatpush.bf16.msra.mxu0 %v538
    %675 = vmatpush.bf16.msra.mxu0 %v537
    %676 = vmatpush.bf16.msra.mxu0 %v536
    %677 = vmatpush.bf16.msra.mxu0 %v535
    %678 = vmatpush.bf16.msra.mxu0 %v534
    %679 = vmatpush.bf16.msra.mxu0 %v533
    %680 = vmatpush.bf16.msra.mxu0 %v532
    %681 = vmatpush.bf16.msra.mxu0 %v531
    %682 = vmatmul.bf16.gmra.mxu0 %v114
    %v683 = vpop.f32.mrf.mxu0
    %v684 = vadd.f32 %v671, %v683
    %v685 = vpop.f32.mrf.mxu0
    %686 = vdwg.mxu0
    %687 = vmatpush.bf16.msra.mxu0 %v546
    %688 = vmatpush.bf16.msra.mxu0 %v545
    %689 = vmatpush.bf16.msra.mxu0 %v544
    %690 = vmatpush.bf16.msra.mxu0 %v543
    %691 = vmatpush.bf16.msra.mxu0 %v542
    %692 = vmatpush.bf16.msra.mxu0 %v541
    %693 = vmatpush.bf16.msra.mxu0 %v540
    %694 = vmatpush.bf16.msra.mxu0 %v539
    %695 = vmatmul.bf16.gmra.mxu0 %v115
    %v696 = vpop.f32.mrf.mxu0
    %v697 = vadd.f32 %v684, %v696
    %v698 = vpop.f32.mrf.mxu0
    %699 = vdwg.mxu0
    %700 = vmatpush.bf16.msra.mxu0 %v554
    %701 = vmatpush.bf16.msra.mxu0 %v553
    %702 = vmatpush.bf16.msra.mxu0 %v552
    %703 = vmatpush.bf16.msra.mxu0 %v551
    %704 = vmatpush.bf16.msra.mxu0 %v550
    %705 = vmatpush.bf16.msra.mxu0 %v549
    %706 = vmatpush.bf16.msra.mxu0 %v548
    %707 = vmatpush.bf16.msra.mxu0 %v547
    %708 = vmatmul.bf16.gmra.mxu0 %v116
    %v709 = vpop.f32.mrf.mxu0
    %v710 = vadd.f32 %v697, %v709
    %v711 = vpop.f32.mrf.mxu0
    %712 = vdwg.mxu0
    %713 = vmatpush.bf16.msra.mxu0 %v562
    %714 = vmatpush.bf16.msra.mxu0 %v561
    %715 = vmatpush.bf16.msra.mxu0 %v560
    %716 = vmatpush.bf16.msra.mxu0 %v559
    %717 = vmatpush.bf16.msra.mxu0 %v558
    %718 = vmatpush.bf16.msra.mxu0 %v557
    %719 = vmatpush.bf16.msra.mxu0 %v556
    %720 = vmatpush.bf16.msra.mxu0 %v555
    %721 = vmatmul.bf16.gmra.mxu0 %v117
    %v722 = vpop.f32.mrf.mxu0
    %v723 = vadd.f32 %v710, %v722
    %v724 = vpop.f32.mrf.mxu0
    %725 = vdwg.mxu0
    %726 = vmatpush.bf16.msra.mxu0 %v570
    %727 = vmatpush.bf16.msra.mxu0 %v569
    %728 = vmatpush.bf16.msra.mxu0 %v568
    %729 = vmatpush.bf16.msra.mxu0 %v567
    %730 = vmatpush.bf16.msra.mxu0 %v566
    %731 = vmatpush.bf16.msra.mxu0 %v565
    %732 = vmatpush.bf16.msra.mxu0 %v564
    %733 = vmatpush.bf16.msra.mxu0 %v563
    %734 = vmatmul.bf16.gmra.mxu0 %v118
    %v735 = vpop.f32.mrf.mxu0
    %v736 = vadd.f32 %v723, %v735
    %v737 = vpop.f32.mrf.mxu0
    %738 = vdwg.mxu0
    %v739 = vmax.f32 %v736, 0.0
    %v740 = vpack.c.bf16 %v739, %v739
    %v741 = vld [vmem:[#allocation7] sm:$0xf]
    %v742 = vld [vmem:[#allocation7 + $0x4] sm:$0xf]
    %v743 = vld [vmem:[#allocation7 + $0x8] sm:$0xf]
    %v744 = vld [vmem:[#allocation7 + $0xc] sm:$0xf]
    %v745 = vld [vmem:[#allocation7 + $0x10] sm:$0xf]
    %v746 = vld [vmem:[#allocation7 + $0x14] sm:$0xf]
    %v747 = vld [vmem:[#allocation7 + $0x18] sm:$0xf]
    %v748 = vld [vmem:[#allocation7 + $0x1c] sm:$0xf]
    %v749 = vld [vmem:[#allocation7 + $0x20] sm:$0xf]
    %v750 = vld [vmem:[#allocation7 + $0x24] sm:$0xf]
    %v751 = vld [vmem:[#allocation7 + $0x28] sm:$0xf]
    %v752 = vld [vmem:[#allocation7 + $0x2c] sm:$0xf]
    %v753 = vld [vmem:[#allocation7 + $0x30] sm:$0xf]
    %v754 = vld [vmem:[#allocation7 + $0x34] sm:$0xf]
    %v755 = vld [vmem:[#allocation7 + $0x38] sm:$0xf]
    %v756 = vld [vmem:[#allocation7 + $0x3c] sm:$0xf]
    %v757 = vld [vmem:[%s4] sm:$0x1]
    %v759 = vperm.slane %v757, 0
    %v777 = vunpack.c.l.b16 %v741
    %v778 = vunpack.c.l.b16 %v742
    %v779 = vunpack.c.l.b16 %v743
    %v780 = vunpack.c.l.b16 %v744
    %v781 = vunpack.c.l.b16 %v745
    %v782 = vunpack.c.l.b16 %v746
    %v783 = vunpack.c.l.b16 %v747
    %v784 = vunpack.c.l.b16 %v748
    %v785 = vunpack.c.l.b16 %v749
    %v786 = vunpack.c.l.b16 %v750
    %v787 = vunpack.c.l.b16 %v751
    %v788 = vunpack.c.l.b16 %v752
    %v789 = vunpack.c.l.b16 %v753
    %v790 = vunpack.c.l.b16 %v754
    %v791 = vunpack.c.l.b16 %v755
    %v792 = vunpack.c.l.b16 %v756
    %v793 = vpack.c.b16 %v778, %v777
    %v794 = vpack.c.b16 %v780, %v779
    %v795 = vpack.c.b16 %v782, %v781
    %v796 = vpack.c.b16 %v784, %v783
    %v797 = vpack.c.b16 %v786, %v785
    %v798 = vpack.c.b16 %v788, %v787
    %v799 = vpack.c.b16 %v790, %v789
    %v800 = vpack.c.b16 %v792, %v791
    %809 = vmatpush.bf16.msra.mxu0 %v800
    %810 = vmatpush.bf16.msra.mxu0 %v799
    %811 = vmatpush.bf16.msra.mxu0 %v798
    %812 = vmatpush.bf16.msra.mxu0 %v797
    %813 = vmatpush.bf16.msra.mxu0 %v796
    %814 = vmatpush.bf16.msra.mxu0 %v795
    %815 = vmatpush.bf16.msra.mxu0 %v794
    %816 = vmatpush.bf16.msra.mxu0 %v793
    %817 = vmatmul.bf16.gmra.mxu0 %v740
    %v818 = vpop.f32.mrf.mxu0
    %v819 = vadd.f32 %v759, %v818
    %v820 = vpop.f32.mrf.mxu0
    %821 = vdwg.mxu0
    %v822 = vmax.f32 %v819, 0.0
    %v823 = vpack.c.bf16 %v822, %v822
    %v824 = vld [vmem:[#allocation8] sm:$0xf]
    %v825 = vld [vmem:[#allocation8 + $0x4] sm:$0xf]
    %v826 = vld [vmem:[#allocation8 + $0x8] sm:$0xf]
    %v827 = vld [vmem:[#allocation8 + $0xc] sm:$0xf]
    %v828 = vld [vmem:[#allocation8 + $0x10] sm:$0xf]
    %v829 = vld [vmem:[#allocation8 + $0x14] sm:$0xf]
    %v830 = vld [vmem:[#allocation8 + $0x18] sm:$0xf]
    %v831 = vld [vmem:[#allocation8 + $0x1c] sm:$0xf]
    %v832 = vld [vmem:[#allocation8 + $0x20] sm:$0xf]
    %v833 = vld [vmem:[#allocation8 + $0x24] sm:$0xf]
    %v834 = vld [vmem:[#allocation8 + $0x28] sm:$0xf]
    %v835 = vld [vmem:[#allocation8 + $0x2c] sm:$0xf]
    %v836 = vld [vmem:[#allocation8 + $0x30] sm:$0xf]
    %v837 = vld [vmem:[#allocation8 + $0x34] sm:$0xf]
    %v838 = vld [vmem:[#allocation8 + $0x38] sm:$0xf]
    %v839 = vld [vmem:[#allocation8 + $0x3c] sm:$0xf]
    %v840 = vld [vmem:[%s6] sm:$0x1]
    %v842 = vperm.slane %v840, 0
    %v860 = vunpack.c.l.b16 %v824
    %v861 = vunpack.c.l.b16 %v825
    %v862 = vunpack.c.l.b16 %v826
    %v863 = vunpack.c.l.b16 %v827
    %v864 = vunpack.c.l.b16 %v828
    %v865 = vunpack.c.l.b16 %v829
    %v866 = vunpack.c.l.b16 %v830
    %v867 = vunpack.c.l.b16 %v831
    %v868 = vunpack.c.l.b16 %v832
    %v869 = vunpack.c.l.b16 %v833
    %v870 = vunpack.c.l.b16 %v834
    %v871 = vunpack.c.l.b16 %v835
    %v872 = vunpack.c.l.b16 %v836
    %v873 = vunpack.c.l.b16 %v837
    %v874 = vunpack.c.l.b16 %v838
    %v875 = vunpack.c.l.b16 %v839
    %v876 = vpack.c.b16 %v861, %v860
    %v877 = vpack.c.b16 %v863, %v862
    %v878 = vpack.c.b16 %v865, %v864
    %v879 = vpack.c.b16 %v867, %v866
    %v880 = vpack.c.b16 %v869, %v868
    %v881 = vpack.c.b16 %v871, %v870
    %v882 = vpack.c.b16 %v873, %v872
    %v883 = vpack.c.b16 %v875, %v874
    %892 = vmatpush.bf16.msra.mxu0 %v883
    %893 = vmatpush.bf16.msra.mxu0 %v882
    %894 = vmatpush.bf16.msra.mxu0 %v881
    %895 = vmatpush.bf16.msra.mxu0 %v880
    %896 = vmatpush.bf16.msra.mxu0 %v879
    %897 = vmatpush.bf16.msra.mxu0 %v878
    %898 = vmatpush.bf16.msra.mxu0 %v877
    %899 = vmatpush.bf16.msra.mxu0 %v876
    %900 = vmatmul.bf16.gmra.mxu0 %v823
    %v901 = vpop.f32.mrf.mxu0
    %v902 = vadd.f32 %v842, %v901
    %v903 = vpop.f32.mrf.mxu0
    %904 = vdwg.mxu0
    %v905 = vtanh.pop %v902
    %v906 = vpack.c.bf16 %v905, %v905
    %907 = vst [vmem:[#allocation10] sm:$0x1] %v906
    // Predicated region
    $region46: #{tpu_custom_call.1} parent=1 // pred_check
      _
    $region47: #{tpu_custom_call.1} parent=1 // pred_check_branch
      %909 = sbr.rel (0) target = $region49
    $region48: #{tpu_custom_call.1} parent=1 // pred_region
      %911 = vsyncadd [#allocation4], 0
      %s913 = sshll.u32 [#allocation10], 4
      %s914 = int_to_ptr.vmem [resolvable:$true] %s913
      %s915 = sshll.u32 %s7, 4
      %s916 = int_to_ptr.hbm [resolvable:$true] %s915
      %918 = dma.vmem_to_hbm [thread:$0]  %s914, 16, %s916, [#allocation4]
    $region49: #{tpu_custom_call.1} parent=1 // pred_fallthru
      _
    // Predicated region
    $region50: #{tpu_custom_call.1} parent=1 // pred_check
      _
    $region51: #{tpu_custom_call.1} parent=1 // pred_check_branch
      %920 = sbr.rel (0) target = $region53
    $region52: #{tpu_custom_call.1} parent=1 // pred_region
      %922 = dma.done [#allocation4], 16
    $region53: #{tpu_custom_call.1} parent=1 // pred_fallthru
      _
    %923 = vsyncpa [#allocation3], 1
    %924 = vsyncpa [#allocation6], 1
    %925 = vsyncpa [#allocation9], 1
    %926 = vsyncpa [#allocation4], 1

</llo_original>
